<compile_context>
chip_gen: v5e
topology: v5e:2x2
jax: 0.10.0
libtpu: 0.0.40
codegen_flags: <defaults>
</compile_context>

<pallas_src>
import jax
import jax.numpy as jnp
from jax.experimental import pallas as pl
from jax.experimental.pallas import tpu as pltpu

_LANE = 128  # lane width


def _round_up(x, m):
    return (x + m - 1) // m * m


def _value_net_kernel(x_ref, w1_ref, b1_ref, w2_ref, b2_ref, w3_ref, b3_ref,
                      out_ref):
    """Fused forward: v = relu(relu(x@W1+b1)@W2+b2)@W3+b3, stored transposed.

    x_ref:   (tm, input_dim)       compute dtype (bf16 by default)
    w*_ref:  padded weights        compute dtype
    b*_ref:  (1, padded feature)   f32  (bias add / ReLU stay on the f32 VPU)
    out_ref: (1, tm)               f32  -- value head, batch along lane axis
    """
    dt = w1_ref.dtype
    x = x_ref[...]
    h1 = jnp.dot(x, w1_ref[...], preferred_element_type=jnp.float32) + b1_ref[...]
    h1 = jnp.maximum(h1, 0.0)
    h2 = jnp.dot(h1.astype(dt), w2_ref[...],
                 preferred_element_type=jnp.float32) + b2_ref[...]
    h2 = jnp.maximum(h2, 0.0)
    v = jnp.dot(h2.astype(dt), w3_ref[...],
                preferred_element_type=jnp.float32) + b3_ref[...]
    # (tm, out_p) -> (out_p, tm) with one XLU transpose, then keep only the
    # real value row -> lane-dense (1, tm) store (batch on the lane axis).
    out_ref[...] = v.T[0:1, :].astype(out_ref.dtype)


def prepare_params(params, *, compute_dtype=jnp.bfloat16):
    """Pad + cast the ValueNetwork parameters ONCE (hoisted out of the
    per-call path so each forward does not re-materialize padded copies).

    params: dict with w1 [in,h], b1 [1,h], w2 [h,h], b2 [1,h], w3 [h,1],
            b3 [1,1]  (weights already transposed vs PyTorch's [out,in]).
    """
    input_dim, hidden_dim = params["w1"].shape
    output_dim = params["w3"].shape[1]  # == 1 for the value head

    # Lane padding: 128 minimum; dims beyond 128 rounded to 256 for the
    # 2x256x256 MXU on v6e/v7x.  (128 is already optimal on v5e; the extra
    # padding there is minor and the kernel is HBM-bound anyway.)
    def pad_feature(d):
        return _round_up(d, _LANE) if d <= _LANE else _round_up(d, 2 * _LANE)

    hid_p = pad_feature(hidden_dim)
    out_p = _round_up(output_dim, _LANE)

    def pad2(a, rows, cols, dtype):
        return jnp.pad(a, ((0, rows - a.shape[0]),
                           (0, cols - a.shape[1]))).astype(dtype)

    return {
        # Weights in compute dtype.  w1's input dim is left UNPADDED so x
        # never needs feature-dim padding.
        "w1": pad2(params["w1"], input_dim, hid_p, compute_dtype),
        "w2": pad2(params["w2"], hid_p, hid_p, compute_dtype),
        "w3": pad2(params["w3"], hid_p, out_p, compute_dtype),
        # Biases stay f32.
        "b1": pad2(params["b1"], 1, hid_p, jnp.float32),
        "b2": pad2(params["b2"], 1, hid_p, jnp.float32),
        "b3": pad2(params["b3"], 1, out_p, jnp.float32),
        "input_dim": input_dim,
        "hidden_dim": hidden_dim,
        "output_dim": output_dim,
        "hid_p": hid_p,
        "out_p": out_p,
        "compute_dtype": compute_dtype,
    }


def _resident(shape):
    """VMEM-resident block: same tile every grid step.  Single-buffered --
    a constant index_map needs no prefetch overlap, and double-buffering
    would just double the weight VMEM footprint (matters on v7x)."""
    index_map = lambda i: (0, 0)
    try:
        return pl.BlockSpec(shape, index_map, pipeline_mode=pl.Buffered(1))
    except TypeError:  # older BlockSpec signature without pipeline_mode
        return pl.BlockSpec(shape, index_map)


def value_network_forward(x, prepared, *, batch_tile=512):
    """Run the fused ValueNetwork forward pass as one Pallas call.

    x: [batch, input_dim] float32
    prepared: output of prepare_params (padded/cast weights + metadata)
    returns: state_value [batch, 1] float32
    """
    batch, input_dim = x.shape
    assert input_dim == prepared["input_dim"], (input_dim, prepared["input_dim"])
    hid_p, out_p = prepared["hid_p"], prepared["out_p"]
    cdt = prepared["compute_dtype"]
    w1, b1 = prepared["w1"], prepared["b1"]
    w2, b2 = prepared["w2"], prepared["b2"]
    w3, b3 = prepared["w3"], prepared["b3"]

    # Batch tile: big (>=512) to amortize per-grid-step overhead; must be a
    # multiple of 128 because batch is the lane axis of the transposed
    # (1, tm) output block.
    tm = _round_up(max(batch_tile, _LANE), _LANE)
    batch_p = _round_up(max(batch, tm), tm)

    x_p = x.astype(cdt)
    if batch_p != batch:
        # Only the batch axis is padded; the feature dim stays unpadded.
        x_p = jnp.pad(x_p, ((0, batch_p - batch), (0, 0)))

    grid = (batch_p // tm,)

    itemsize = jnp.dtype(cdt).itemsize
    flops = 2 * batch_p * (input_dim * hid_p + hid_p * hid_p + hid_p * out_p)
    bytes_accessed = (x_p.size * itemsize
                      + (w1.size + w2.size + w3.size) * itemsize
                      + (b1.size + b2.size + b3.size) * 4
                      + batch_p * 4)  # narrow transposed f32 output
    cost = pl.CostEstimate(flops=flops, transcendentals=0,
                           bytes_accessed=bytes_accessed)

    # Rough VMEM budget: single-buffered resident weights/biases +
    # double-buffered streamed x/out tiles + f32 intermediates.
    vmem_needed = ((w1.size + w2.size + w3.size) * itemsize
                   + (b1.size + b2.size + b3.size) * 4
                   + 2 * tm * input_dim * itemsize
                   + 2 * tm * 4
                   + 3 * tm * hid_p * 4 + tm * out_p * 4)
    vmem_limit = int(min(max(2 * vmem_needed, 32 * 1024 * 1024),
                         100 * 1024 * 1024))
    # TODO(synk): if resident weights (~2*hid_p^2 bytes in bf16) approach half
    # of v7x's 64 MiB VMEM (hidden_dim ~ 3-4K), switch to a hidden-dim grid
    # axis marked "arbitrary" with an f32 accumulator scratch instead of
    # keeping w2 fully resident.

    out_t = pl.pallas_call(
        _value_net_kernel,
        out_shape=jax.ShapeDtypeStruct((1, batch_p), jnp.float32),
        grid=grid,
        in_specs=[
            # x tile, streamed (double-buffered) over the batch grid axis.
            pl.BlockSpec((tm, input_dim), lambda i: (i, 0)),
            _resident((input_dim, hid_p)),  # w1
            _resident((1, hid_p)),          # b1
            _resident((hid_p, hid_p)),      # w2
            _resident((1, hid_p)),          # b2
            _resident((hid_p, out_p)),      # w3
            _resident((1, out_p)),          # b3
        ],
        # Transposed, lane-dense value output: batch along the lane axis.
        out_specs=pl.BlockSpec((1, tm), lambda i: (0, i)),
        compiler_params=pltpu.CompilerParams(
            # "parallel" shards grid steps across v7x's 2 TensorCores
            # (no-op on v5e/v6e); needs batch_p/tm >= 2 to use both cores.
            dimension_semantics=("parallel",),
            vmem_limit_bytes=vmem_limit,
        ),
        cost_estimate=cost,
    )(x_p, w1, b1, w2, b2, w3, b3)

    # (1, batch_p) -> [batch, 1], dropping batch padding.
    return out_t[0, :batch].reshape(batch, 1)


def init_params(key, input_dim, hidden_dim):
    """Deterministic init matching ValueNetwork parameter shapes.

    nn.Linear(in, out) has weight [out, in] and bias [out]; we store the
    transposed weight [in, out] and bias as [1, out].  Uses PyTorch's default
    U(-1/sqrt(in), 1/sqrt(in)) range.
    """
    keys = jax.random.split(key, 6)

    def linear(kw, kb, fan_in, fan_out):
        bound = 1.0 / jnp.sqrt(fan_in)
        w = jax.random.uniform(kw, (fan_in, fan_out), jnp.float32, -bound, bound)
        b = jax.random.uniform(kb, (1, fan_out), jnp.float32, -bound, bound)
        return w, b

    w1, b1 = linear(keys[0], keys[1], input_dim, hidden_dim)
    w2, b2 = linear(keys[2], keys[3], hidden_dim, hidden_dim)
    w3, b3 = linear(keys[4], keys[5], hidden_dim, 1)  # value head -> scalar
    return {"w1": w1, "b1": b1, "w2": w2, "b2": b2, "w3": w3, "b3": b3}


def reference_forward(x, params):
    """Pure-JAX reference for correctness checking."""
    h1 = jnp.maximum(x @ params["w1"] + params["b1"], 0.0)
    h2 = jnp.maximum(h1 @ params["w2"] + params["b2"], 0.0)
    return h2 @ params["w3"] + params["b3"]


if __name__ == "__main__":
    input_dim, hidden_dim = 16, 32
    batch = 4

    key = jax.random.PRNGKey(0)
    key_x, key_p = jax.random.split(key)
    x = jax.random.normal(key_x, (batch, input_dim), jnp.float32)
    params = init_params(key_p, input_dim, hidden_dim)
    ref = reference_forward(x, params)

    # f32-operand path: tight correctness check.
    prepared_f32 = prepare_params(params, compute_dtype=jnp.float32)
    v_f32 = jax.block_until_ready(value_network_forward(x, prepared_f32))
    assert v_f32.shape == (batch, 1), v_f32.shape
    assert jnp.allclose(v_f32, ref, atol=1e-5, rtol=1e-5), "f32 mismatch vs reference"

    # bf16-operand path (default fast path, f32 accumulation): looser check.
    prepared_bf16 = prepare_params(params)  # compute_dtype=bfloat16
    v_bf16 = jax.block_until_ready(value_network_forward(x, prepared_bf16))
    assert v_bf16.shape == (batch, 1), v_bf16.shape
    assert jnp.allclose(v_bf16, ref, atol=5e-2, rtol=5e-2), "bf16 mismatch vs reference"

    print("KERNEL_OK")
</pallas_src>

<mosaic_0001>
module attributes {stable_mosaic.version = 11 : i64} {
  func.func @_value_net_kernel(%arg0: i32, %arg1: memref<512x16xf32, #tpu.memory_space<vmem>>, %arg2: memref<16x128xf32, #tpu.memory_space<vmem>>, %arg3: memref<1x128xf32, #tpu.memory_space<vmem>>, %arg4: memref<128x128xf32, #tpu.memory_space<vmem>>, %arg5: memref<1x128xf32, #tpu.memory_space<vmem>>, %arg6: memref<128x128xf32, #tpu.memory_space<vmem>>, %arg7: memref<1x128xf32, #tpu.memory_space<vmem>>, %arg8: memref<1x512xf32, #tpu.memory_space<vmem>>) attributes {dimension_semantics = [#tpu.dimension_semantics<parallel>], iteration_bounds = array<i64: 1>, scalar_prefetch = 0 : i64, scratch_operands = 0 : i64, tpu.core_type = #tpu.core_type<tc>, window_params = [{transform_indices = @transform_0, window_bounds = array<i64: 512, 16>}, {pipeline_mode = #tpu.pipeline_mode<synchronous>, transform_indices = @transform_1, window_bounds = array<i64: 16, 128>}, {pipeline_mode = #tpu.pipeline_mode<synchronous>, transform_indices = @transform_2, window_bounds = array<i64: 1, 128>}, {pipeline_mode = #tpu.pipeline_mode<synchronous>, transform_indices = @transform_3, window_bounds = array<i64: 128, 128>}, {pipeline_mode = #tpu.pipeline_mode<synchronous>, transform_indices = @transform_4, window_bounds = array<i64: 1, 128>}, {pipeline_mode = #tpu.pipeline_mode<synchronous>, transform_indices = @transform_5, window_bounds = array<i64: 128, 128>}, {pipeline_mode = #tpu.pipeline_mode<synchronous>, transform_indices = @transform_6, window_bounds = array<i64: 1, 128>}, {transform_indices = @transform_7, window_bounds = array<i64: 1, 512>}]} {
    %c0 = arith.constant 0 : index
    %c0_0 = arith.constant 0 : index
    %0 = vector.load %arg1[%c0, %c0_0] : memref<512x16xf32, #tpu.memory_space<vmem>>, vector<512x16xf32>
    %c0_1 = arith.constant 0 : index
    %c0_2 = arith.constant 0 : index
    %1 = vector.load %arg2[%c0_1, %c0_2] : memref<16x128xf32, #tpu.memory_space<vmem>>, vector<16x128xf32>
    %cst = arith.constant dense<0.000000e+00> : vector<512x128xf32>
    %2 = tpu.matmul %0, %1, %cst {dimension_numbers = #tpu.dot_dimension_numbers<[1], [0], [0], [1], [0, 0, 1, 1], [], []>} : vector<512x16xf32>, vector<16x128xf32>, vector<512x128xf32> -> vector<512x128xf32>
    %c0_3 = arith.constant 0 : index
    %c0_4 = arith.constant 0 : index
    %3 = vector.load %arg3[%c0_3, %c0_4] : memref<1x128xf32, #tpu.memory_space<vmem>>, vector<1x128xf32>
    %4 = vector.broadcast %3 : vector<1x128xf32> to vector<512x128xf32>
    %5 = arith.addf %2, %4 : vector<512x128xf32>
    %cst_5 = arith.constant 0.000000e+00 : f32
    %6 = vector.broadcast %cst_5 : f32 to vector<512x128xf32>
    %7 = arith.maximumf %5, %6 : vector<512x128xf32>
    %c0_6 = arith.constant 0 : index
    %c0_7 = arith.constant 0 : index
    %8 = vector.load %arg4[%c0_6, %c0_7] : memref<128x128xf32, #tpu.memory_space<vmem>>, vector<128x128xf32>
    %cst_8 = arith.constant dense<0.000000e+00> : vector<512x128xf32>
    %9 = tpu.matmul %7, %8, %cst_8 {dimension_numbers = #tpu.dot_dimension_numbers<[1], [0], [0], [1], [0, 0, 1, 1], [], []>} : vector<512x128xf32>, vector<128x128xf32>, vector<512x128xf32> -> vector<512x128xf32>
    %c0_9 = arith.constant 0 : index
    %c0_10 = arith.constant 0 : index
    %10 = vector.load %arg5[%c0_9, %c0_10] : memref<1x128xf32, #tpu.memory_space<vmem>>, vector<1x128xf32>
    %11 = vector.broadcast %10 : vector<1x128xf32> to vector<512x128xf32>
    %12 = arith.addf %9, %11 : vector<512x128xf32>
    %cst_11 = arith.constant 0.000000e+00 : f32
    %13 = vector.broadcast %cst_11 : f32 to vector<512x128xf32>
    %14 = arith.maximumf %12, %13 : vector<512x128xf32>
    %c0_12 = arith.constant 0 : index
    %c0_13 = arith.constant 0 : index
    %15 = vector.load %arg6[%c0_12, %c0_13] : memref<128x128xf32, #tpu.memory_space<vmem>>, vector<128x128xf32>
    %cst_14 = arith.constant dense<0.000000e+00> : vector<512x128xf32>
    %16 = tpu.matmul %14, %15, %cst_14 {dimension_numbers = #tpu.dot_dimension_numbers<[1], [0], [0], [1], [0, 0, 1, 1], [], []>} : vector<512x128xf32>, vector<128x128xf32>, vector<512x128xf32> -> vector<512x128xf32>
    %c0_15 = arith.constant 0 : index
    %c0_16 = arith.constant 0 : index
    %17 = vector.load %arg7[%c0_15, %c0_16] : memref<1x128xf32, #tpu.memory_space<vmem>>, vector<1x128xf32>
    %18 = vector.broadcast %17 : vector<1x128xf32> to vector<512x128xf32>
    %19 = arith.addf %16, %18 : vector<512x128xf32>
    %20 = tpu.transpose %19, [1, 0] : vector<512x128xf32> -> vector<128x512xf32>
    %21 = vector.extract_strided_slice %20 {offsets = [0, 0], sizes = [1, 512], strides = [1, 1]} : vector<128x512xf32> to vector<1x512xf32>
    %c0_17 = arith.constant 0 : index
    %c0_18 = arith.constant 0 : index
    %22 = vector.load %arg8[%c0_17, %c0_18] : memref<1x512xf32, #tpu.memory_space<vmem>>, vector<1x512xf32>
    tpu.vector_store %arg8[%c0_17, %c0_18], %21 {strides = array<i32>} : memref<1x512xf32, #tpu.memory_space<vmem>>, vector<1x512xf32>,
    return
  }
  func.func @transform_0(%arg0: i32) -> (i32, i32) {
    %c0_i32 = arith.constant 0 : i32
    %c0_i32_0 = arith.constant 0 : i32
    return %arg0, %c0_i32 : i32, i32
  }
  func.func @transform_1(%arg0: i32) -> (i32, i32) {
    %c0_i32 = arith.constant 0 : i32
    %c0_i32_0 = arith.constant 0 : i32
    %c0_i32_1 = arith.constant 0 : i32
    return %c0_i32, %c0_i32_0 : i32, i32
  }
  func.func @transform_2(%arg0: i32) -> (i32, i32) {
    %c0_i32 = arith.constant 0 : i32
    %c0_i32_0 = arith.constant 0 : i32
    %c0_i32_1 = arith.constant 0 : i32
    return %c0_i32, %c0_i32_0 : i32, i32
  }
  func.func @transform_3(%arg0: i32) -> (i32, i32) {
    %c0_i32 = arith.constant 0 : i32
    %c0_i32_0 = arith.constant 0 : i32
    %c0_i32_1 = arith.constant 0 : i32
    return %c0_i32, %c0_i32_0 : i32, i32
  }
  func.func @transform_4(%arg0: i32) -> (i32, i32) {
    %c0_i32 = arith.constant 0 : i32
    %c0_i32_0 = arith.constant 0 : i32
    %c0_i32_1 = arith.constant 0 : i32
    return %c0_i32, %c0_i32_0 : i32, i32
  }
  func.func @transform_5(%arg0: i32) -> (i32, i32) {
    %c0_i32 = arith.constant 0 : i32
    %c0_i32_0 = arith.constant 0 : i32
    %c0_i32_1 = arith.constant 0 : i32
    return %c0_i32, %c0_i32_0 : i32, i32
  }
  func.func @transform_6(%arg0: i32) -> (i32, i32) {
    %c0_i32 = arith.constant 0 : i32
    %c0_i32_0 = arith.constant 0 : i32
    %c0_i32_1 = arith.constant 0 : i32
    return %c0_i32, %c0_i32_0 : i32, i32
  }
  func.func @transform_7(%arg0: i32) -> (i32, i32) {
    %c0_i32 = arith.constant 0 : i32
    %c0_i32_0 = arith.constant 0 : i32
    return %c0_i32, %arg0 : i32, i32
  }
}

</mosaic_0001>

<llo_original>
// kernel: tpu_custom_call.1
$region0: #{tpu_custom_call.1}
  #allocation0 [shape = 'u32[]', space=smem, size = 0x4, offset = 0x4, fixed_abs, tag = 'smem constant byte address 0x4 - core index']
  #allocation1 [shape = 'u32[72,128]{1,0:T(1,128)}', space=vmem, size = 0x9000, scoped, tag = 'internal scratch']
  %s0 = inlined_call_operand.vmem [shape: f32[512,16], index: 0, kind: input, shape index: {}]
  %s1 = inlined_call_operand.vmem [shape: f32[16,128], index: 1, kind: input, shape index: {}]
  %s2 = inlined_call_operand.vmem [shape: f32[1,128], index: 2, kind: input, shape index: {}]
  %s3 = inlined_call_operand.vmem [shape: f32[128,128], index: 3, kind: input, shape index: {}]
  %s4 = inlined_call_operand.vmem [shape: f32[1,128], index: 4, kind: input, shape index: {}]
  %s5 = inlined_call_operand.vmem [shape: f32[128,128], index: 5, kind: input, shape index: {}]
  %s6 = inlined_call_operand.vmem [shape: f32[1,128], index: 6, kind: input, shape index: {}]
  %s7 = inlined_call_operand.hbm [shape: f32[1,512], index: 7, kind: output, shape index: {}]
  %s8 = sld [smem:[#allocation0]]
  $region38: #{tpu_custom_call.1} parent=0
    _
  %s10 = ssub.s32 1, %s8
  %s11 = scalar_select 0, %s10, %s8
  $region1: #{tpu_custom_call.1} parent=0
    #allocation2 [shape = 'u8[2048]{0}', space=vmem, size = 0x800, scoped, tag = 'output window, operand 0, single buffered']
    #allocation3 [shape = 's32[1]{0}', space=sflag, size = 0x4, scoped, tag = 'scoped memory for tpu_custom_call.1']
    %12 = vsyncpa [#allocation3], 0
    // Predicated region
    $region2: #{tpu_custom_call.1} parent=1 // pred_check
      _
    $region3: #{tpu_custom_call.1} parent=1 // pred_check_branch
      %14 = sbr.rel (0) target = $region5
    $region4: #{tpu_custom_call.1} parent=1 // pred_region
      _
    $region5: #{tpu_custom_call.1} parent=1 // pred_fallthru
      _
    // Predicated region
    $region6: #{tpu_custom_call.1} parent=1 // pred_check
      _
    $region7: #{tpu_custom_call.1} parent=1 // pred_check_branch
      %16 = sbr.rel (0) target = $region9
    $region8: #{tpu_custom_call.1} parent=1 // pred_region
      _
    $region9: #{tpu_custom_call.1} parent=1 // pred_fallthru
      _
    // Predicated region
    $region10: #{tpu_custom_call.1} parent=1 // pred_check
      _
    $region11: #{tpu_custom_call.1} parent=1 // pred_check_branch
      %18 = sbr.rel (0) target = $region13
    $region12: #{tpu_custom_call.1} parent=1 // pred_region
      _
    $region13: #{tpu_custom_call.1} parent=1 // pred_fallthru
      _
    // Predicated region
    $region14: #{tpu_custom_call.1} parent=1 // pred_check
      _
    $region15: #{tpu_custom_call.1} parent=1 // pred_check_branch
      %20 = sbr.rel (0) target = $region17
    $region16: #{tpu_custom_call.1} parent=1 // pred_region
      _
    $region17: #{tpu_custom_call.1} parent=1 // pred_fallthru
      _
    // Predicated region
    $region18: #{tpu_custom_call.1} parent=1 // pred_check
      _
    $region19: #{tpu_custom_call.1} parent=1 // pred_check_branch
      %22 = sbr.rel (0) target = $region21
    $region20: #{tpu_custom_call.1} parent=1 // pred_region
      _
    $region21: #{tpu_custom_call.1} parent=1 // pred_fallthru
      _
    // Predicated region
    $region22: #{tpu_custom_call.1} parent=1 // pred_check
      _
    $region23: #{tpu_custom_call.1} parent=1 // pred_check_branch
      %24 = sbr.rel (0) target = $region25
    $region24: #{tpu_custom_call.1} parent=1 // pred_region
      _
    $region25: #{tpu_custom_call.1} parent=1 // pred_fallthru
      _
    // Predicated region
    $region26: #{tpu_custom_call.1} parent=1 // pred_check
      _
    $region27: #{tpu_custom_call.1} parent=1 // pred_check_branch
      %26 = sbr.rel (0) target = $region29
    $region28: #{tpu_custom_call.1} parent=1 // pred_region
      _
    $region29: #{tpu_custom_call.1} parent=1 // pred_fallthru
      _
    %v27 = vld [vmem:[%s0] sm:$0xff]
    %v28 = vld [vmem:[%s0 + $0x8] sm:$0xff]
    %v29 = vld [vmem:[%s0 + $0x10] sm:$0xff]
    %v30 = vld [vmem:[%s0 + $0x18] sm:$0xff]
    %v31 = vld [vmem:[%s0 + $0x20] sm:$0xff]
    %v32 = vld [vmem:[%s0 + $0x28] sm:$0xff]
    %v33 = vld [vmem:[%s0 + $0x30] sm:$0xff]
    %v34 = vld [vmem:[%s0 + $0x38] sm:$0xff]
    %v35 = vld [vmem:[%s0 + $0x40] sm:$0xff]
    %v36 = vld [vmem:[%s0 + $0x48] sm:$0xff]
    %v37 = vld [vmem:[%s0 + $0x50] sm:$0xff]
    %v38 = vld [vmem:[%s0 + $0x58] sm:$0xff]
    %v39 = vld [vmem:[%s0 + $0x60] sm:$0xff]
    %v40 = vld [vmem:[%s0 + $0x68] sm:$0xff]
    %v41 = vld [vmem:[%s0 + $0x70] sm:$0xff]
    %v42 = vld [vmem:[%s0 + $0x78] sm:$0xff]
    %v43 = vld [vmem:[%s0 + $0x80] sm:$0xff]
    %v44 = vld [vmem:[%s0 + $0x88] sm:$0xff]
    %v45 = vld [vmem:[%s0 + $0x90] sm:$0xff]
    %v46 = vld [vmem:[%s0 + $0x98] sm:$0xff]
    %v47 = vld [vmem:[%s0 + $0xa0] sm:$0xff]
    %v48 = vld [vmem:[%s0 + $0xa8] sm:$0xff]
    %v49 = vld [vmem:[%s0 + $0xb0] sm:$0xff]
    %v50 = vld [vmem:[%s0 + $0xb8] sm:$0xff]
    %v51 = vld [vmem:[%s0 + $0xc0] sm:$0xff]
    %v52 = vld [vmem:[%s0 + $0xc8] sm:$0xff]
    %v53 = vld [vmem:[%s0 + $0xd0] sm:$0xff]
    %v54 = vld [vmem:[%s0 + $0xd8] sm:$0xff]
    %v55 = vld [vmem:[%s0 + $0xe0] sm:$0xff]
    %v56 = vld [vmem:[%s0 + $0xe8] sm:$0xff]
    %v57 = vld [vmem:[%s0 + $0xf0] sm:$0xff]
    %v58 = vld [vmem:[%s0 + $0xf8] sm:$0xff]
    %v59 = vld [vmem:[%s0 + $0x100] sm:$0xff]
    %v60 = vld [vmem:[%s0 + $0x108] sm:$0xff]
    %v61 = vld [vmem:[%s0 + $0x110] sm:$0xff]
    %v62 = vld [vmem:[%s0 + $0x118] sm:$0xff]
    %v63 = vld [vmem:[%s0 + $0x120] sm:$0xff]
    %v64 = vld [vmem:[%s0 + $0x128] sm:$0xff]
    %v65 = vld [vmem:[%s0 + $0x130] sm:$0xff]
    %v66 = vld [vmem:[%s0 + $0x138] sm:$0xff]
    %v67 = vld [vmem:[%s0 + $0x140] sm:$0xff]
    %v68 = vld [vmem:[%s0 + $0x148] sm:$0xff]
    %v69 = vld [vmem:[%s0 + $0x150] sm:$0xff]
    %v70 = vld [vmem:[%s0 + $0x158] sm:$0xff]
    %v71 = vld [vmem:[%s0 + $0x160] sm:$0xff]
    %v72 = vld [vmem:[%s0 + $0x168] sm:$0xff]
    %v73 = vld [vmem:[%s0 + $0x170] sm:$0xff]
    %v74 = vld [vmem:[%s0 + $0x178] sm:$0xff]
    %v75 = vld [vmem:[%s0 + $0x180] sm:$0xff]
    %v76 = vld [vmem:[%s0 + $0x188] sm:$0xff]
    %v77 = vld [vmem:[%s0 + $0x190] sm:$0xff]
    %v78 = vld [vmem:[%s0 + $0x198] sm:$0xff]
    %v79 = vld [vmem:[%s0 + $0x1a0] sm:$0xff]
    %v80 = vld [vmem:[%s0 + $0x1a8] sm:$0xff]
    %v81 = vld [vmem:[%s0 + $0x1b0] sm:$0xff]
    %v82 = vld [vmem:[%s0 + $0x1b8] sm:$0xff]
    %v83 = vld [vmem:[%s0 + $0x1c0] sm:$0xff]
    %v84 = vld [vmem:[%s0 + $0x1c8] sm:$0xff]
    %v85 = vld [vmem:[%s0 + $0x1d0] sm:$0xff]
    %v86 = vld [vmem:[%s0 + $0x1d8] sm:$0xff]
    %v87 = vld [vmem:[%s0 + $0x1e0] sm:$0xff]
    %v88 = vld [vmem:[%s0 + $0x1e8] sm:$0xff]
    %v89 = vld [vmem:[%s0 + $0x1f0] sm:$0xff]
    %v90 = vld [vmem:[%s0 + $0x1f8] sm:$0xff]
    %v91 = vld [vmem:[%s1] sm:$0xff]
    %v92 = vld [vmem:[%s1 + $0x8] sm:$0xff]
    %v93 = vld [vmem:[%s2] sm:$0x1]
    %v95 = vperm.slane %v93, 0
    %vm97 = vcmask 130048
    %v99 = vsel %vm97, %v27, 0
    %v102 = vsel %vm97, %v28, 0
    %v105 = vsel %vm97, %v29, 0
    %v108 = vsel %vm97, %v30, 0
    %v111 = vsel %vm97, %v31, 0
    %v114 = vsel %vm97, %v32, 0
    %v117 = vsel %vm97, %v33, 0
    %v120 = vsel %vm97, %v34, 0
    %v123 = vsel %vm97, %v35, 0
    %v126 = vsel %vm97, %v36, 0
    %v129 = vsel %vm97, %v37, 0
    %v132 = vsel %vm97, %v38, 0
    %v135 = vsel %vm97, %v39, 0
    %v138 = vsel %vm97, %v40, 0
    %v141 = vsel %vm97, %v41, 0
    %v144 = vsel %vm97, %v42, 0
    %v147 = vsel %vm97, %v43, 0
    %v150 = vsel %vm97, %v44, 0
    %v153 = vsel %vm97, %v45, 0
    %v156 = vsel %vm97, %v46, 0
    %v159 = vsel %vm97, %v47, 0
    %v162 = vsel %vm97, %v48, 0
    %v165 = vsel %vm97, %v49, 0
    %v168 = vsel %vm97, %v50, 0
    %v171 = vsel %vm97, %v51, 0
    %v174 = vsel %vm97, %v52, 0
    %v177 = vsel %vm97, %v53, 0
    %v180 = vsel %vm97, %v54, 0
    %v183 = vsel %vm97, %v55, 0
    %v186 = vsel %vm97, %v56, 0
    %v189 = vsel %vm97, %v57, 0
    %v192 = vsel %vm97, %v58, 0
    %v195 = vsel %vm97, %v59, 0
    %v198 = vsel %vm97, %v60, 0
    %v201 = vsel %vm97, %v61, 0
    %v204 = vsel %vm97, %v62, 0
    %v207 = vsel %vm97, %v63, 0
    %v210 = vsel %vm97, %v64, 0
    %v213 = vsel %vm97, %v65, 0
    %v216 = vsel %vm97, %v66, 0
    %v219 = vsel %vm97, %v67, 0
    %v222 = vsel %vm97, %v68, 0
    %v225 = vsel %vm97, %v69, 0
    %v228 = vsel %vm97, %v70, 0
    %v231 = vsel %vm97, %v71, 0
    %v234 = vsel %vm97, %v72, 0
    %v237 = vsel %vm97, %v73, 0
    %v240 = vsel %vm97, %v74, 0
    %v243 = vsel %vm97, %v75, 0
    %v246 = vsel %vm97, %v76, 0
    %v249 = vsel %vm97, %v77, 0
    %v252 = vsel %vm97, %v78, 0
    %v255 = vsel %vm97, %v79, 0
    %v258 = vsel %vm97, %v80, 0
    %v261 = vsel %vm97, %v81, 0
    %v264 = vsel %vm97, %v82, 0
    %v267 = vsel %vm97, %v83, 0
    %v270 = vsel %vm97, %v84, 0
    %v273 = vsel %vm97, %v85, 0
    %v276 = vsel %vm97, %v86, 0
    %v279 = vsel %vm97, %v87, 0
    %v282 = vsel %vm97, %v88, 0
    %v285 = vsel %vm97, %v89, 0
    %v288 = vsel %vm97, %v90, 0
    %290 = vmatpush.msra.mxu0 0.0
    %291 = vmatpush.msra.mxu0 0.0
    %292 = vmatpush.msra.mxu0 0.0
    %293 = vmatpush.msra.mxu0 0.0
    %294 = vmatpush.msra.mxu0 0.0
    %295 = vmatpush.msra.mxu0 0.0
    %296 = vmatpush.msra.mxu0 0.0
    %297 = vmatpush.msra.mxu0 0.0
    %298 = vmatpush.msra.mxu0 0.0
    %299 = vmatpush.msra.mxu0 0.0
    %300 = vmatpush.msra.mxu0 0.0
    %301 = vmatpush.msra.mxu0 0.0
    %302 = vmatpush.msra.mxu0 0.0
    %303 = vmatpush.msra.mxu0 0.0
    %304 = vmatpush.msra.mxu0 %v92
    %305 = vmatpush.msra.mxu0 %v91
    %306 = vmatmul.f32.gmra.mxu0 %v99
    %v307 = vpop.f32.mrf.mxu0
    %v308 = vadd.f32 %v95, %v307
    %309 = vmatmul.f32.gmra.mxu0 %v102
    %v310 = vpop.f32.mrf.mxu0
    %v311 = vadd.f32 %v95, %v310
    %312 = vmatmul.f32.gmra.mxu0 %v105
    %v313 = vpop.f32.mrf.mxu0
    %v314 = vadd.f32 %v95, %v313
    %315 = vmatmul.f32.gmra.mxu0 %v108
    %v316 = vpop.f32.mrf.mxu0
    %v317 = vadd.f32 %v95, %v316
    %318 = vmatmul.f32.gmra.mxu0 %v111
    %v319 = vpop.f32.mrf.mxu0
    %v320 = vadd.f32 %v95, %v319
    %321 = vmatmul.f32.gmra.mxu0 %v114
    %v322 = vpop.f32.mrf.mxu0
    %v323 = vadd.f32 %v95, %v322
    %324 = vmatmul.f32.gmra.mxu0 %v117
    %v325 = vpop.f32.mrf.mxu0
    %v326 = vadd.f32 %v95, %v325
    %327 = vmatmul.f32.gmra.mxu0 %v120
    %v328 = vpop.f32.mrf.mxu0
    %v329 = vadd.f32 %v95, %v328
    %330 = vmatmul.f32.gmra.mxu0 %v123
    %v331 = vpop.f32.mrf.mxu0
    %v332 = vadd.f32 %v95, %v331
    %333 = vmatmul.f32.gmra.mxu0 %v126
    %v334 = vpop.f32.mrf.mxu0
    %v335 = vadd.f32 %v95, %v334
    %336 = vmatmul.f32.gmra.mxu0 %v129
    %v337 = vpop.f32.mrf.mxu0
    %v338 = vadd.f32 %v95, %v337
    %339 = vmatmul.f32.gmra.mxu0 %v132
    %v340 = vpop.f32.mrf.mxu0
    %v341 = vadd.f32 %v95, %v340
    %342 = vmatmul.f32.gmra.mxu0 %v135
    %v343 = vpop.f32.mrf.mxu0
    %v344 = vadd.f32 %v95, %v343
    %345 = vmatmul.f32.gmra.mxu0 %v138
    %v346 = vpop.f32.mrf.mxu0
    %v347 = vadd.f32 %v95, %v346
    %348 = vmatmul.f32.gmra.mxu0 %v141
    %v349 = vpop.f32.mrf.mxu0
    %v350 = vadd.f32 %v95, %v349
    %351 = vmatmul.f32.gmra.mxu0 %v144
    %v352 = vpop.f32.mrf.mxu0
    %v353 = vadd.f32 %v95, %v352
    %354 = vmatmul.f32.gmra.mxu0 %v147
    %v355 = vpop.f32.mrf.mxu0
    %v356 = vadd.f32 %v95, %v355
    %357 = vmatmul.f32.gmra.mxu0 %v150
    %v358 = vpop.f32.mrf.mxu0
    %v359 = vadd.f32 %v95, %v358
    %360 = vmatmul.f32.gmra.mxu0 %v153
    %v361 = vpop.f32.mrf.mxu0
    %v362 = vadd.f32 %v95, %v361
    %363 = vmatmul.f32.gmra.mxu0 %v156
    %v364 = vpop.f32.mrf.mxu0
    %v365 = vadd.f32 %v95, %v364
    %366 = vmatmul.f32.gmra.mxu0 %v159
    %v367 = vpop.f32.mrf.mxu0
    %v368 = vadd.f32 %v95, %v367
    %369 = vmatmul.f32.gmra.mxu0 %v162
    %v370 = vpop.f32.mrf.mxu0
    %v371 = vadd.f32 %v95, %v370
    %372 = vmatmul.f32.gmra.mxu0 %v165
    %v373 = vpop.f32.mrf.mxu0
    %v374 = vadd.f32 %v95, %v373
    %375 = vmatmul.f32.gmra.mxu0 %v168
    %v376 = vpop.f32.mrf.mxu0
    %v377 = vadd.f32 %v95, %v376
    %378 = vmatmul.f32.gmra.mxu0 %v171
    %v379 = vpop.f32.mrf.mxu0
    %v380 = vadd.f32 %v95, %v379
    %381 = vmatmul.f32.gmra.mxu0 %v174
    %v382 = vpop.f32.mrf.mxu0
    %v383 = vadd.f32 %v95, %v382
    %384 = vmatmul.f32.gmra.mxu0 %v177
    %v385 = vpop.f32.mrf.mxu0
    %v386 = vadd.f32 %v95, %v385
    %387 = vmatmul.f32.gmra.mxu0 %v180
    %v388 = vpop.f32.mrf.mxu0
    %v389 = vadd.f32 %v95, %v388
    %390 = vmatmul.f32.gmra.mxu0 %v183
    %v391 = vpop.f32.mrf.mxu0
    %v392 = vadd.f32 %v95, %v391
    %393 = vmatmul.f32.gmra.mxu0 %v186
    %v394 = vpop.f32.mrf.mxu0
    %v395 = vadd.f32 %v95, %v394
    %396 = vmatmul.f32.gmra.mxu0 %v189
    %v397 = vpop.f32.mrf.mxu0
    %v398 = vadd.f32 %v95, %v397
    %399 = vmatmul.f32.gmra.mxu0 %v192
    %v400 = vpop.f32.mrf.mxu0
    %v401 = vadd.f32 %v95, %v400
    %402 = vmatmul.f32.gmra.mxu0 %v195
    %v403 = vpop.f32.mrf.mxu0
    %v404 = vadd.f32 %v95, %v403
    %405 = vmatmul.f32.gmra.mxu0 %v198
    %v406 = vpop.f32.mrf.mxu0
    %v407 = vadd.f32 %v95, %v406
    %408 = vmatmul.f32.gmra.mxu0 %v201
    %v409 = vpop.f32.mrf.mxu0
    %v410 = vadd.f32 %v95, %v409
    %411 = vmatmul.f32.gmra.mxu0 %v204
    %v412 = vpop.f32.mrf.mxu0
    %v413 = vadd.f32 %v95, %v412
    %414 = vmatmul.f32.gmra.mxu0 %v207
    %v415 = vpop.f32.mrf.mxu0
    %v416 = vadd.f32 %v95, %v415
    %417 = vmatmul.f32.gmra.mxu0 %v210
    %v418 = vpop.f32.mrf.mxu0
    %v419 = vadd.f32 %v95, %v418
    %420 = vmatmul.f32.gmra.mxu0 %v213
    %v421 = vpop.f32.mrf.mxu0
    %v422 = vadd.f32 %v95, %v421
    %423 = vmatmul.f32.gmra.mxu0 %v216
    %v424 = vpop.f32.mrf.mxu0
    %v425 = vadd.f32 %v95, %v424
    %426 = vmatmul.f32.gmra.mxu0 %v219
    %v427 = vpop.f32.mrf.mxu0
    %v428 = vadd.f32 %v95, %v427
    %429 = vmatmul.f32.gmra.mxu0 %v222
    %v430 = vpop.f32.mrf.mxu0
    %v431 = vadd.f32 %v95, %v430
    %432 = vmatmul.f32.gmra.mxu0 %v225
    %v433 = vpop.f32.mrf.mxu0
    %v434 = vadd.f32 %v95, %v433
    %435 = vmatmul.f32.gmra.mxu0 %v228
    %v436 = vpop.f32.mrf.mxu0
    %v437 = vadd.f32 %v95, %v436
    %438 = vmatmul.f32.gmra.mxu0 %v231
    %v439 = vpop.f32.mrf.mxu0
    %v440 = vadd.f32 %v95, %v439
    %441 = vmatmul.f32.gmra.mxu0 %v234
    %v442 = vpop.f32.mrf.mxu0
    %v443 = vadd.f32 %v95, %v442
    %444 = vmatmul.f32.gmra.mxu0 %v237
    %v445 = vpop.f32.mrf.mxu0
    %v446 = vadd.f32 %v95, %v445
    %447 = vmatmul.f32.gmra.mxu0 %v240
    %v448 = vpop.f32.mrf.mxu0
    %v449 = vadd.f32 %v95, %v448
    %450 = vmatmul.f32.gmra.mxu0 %v243
    %v451 = vpop.f32.mrf.mxu0
    %v452 = vadd.f32 %v95, %v451
    %453 = vmatmul.f32.gmra.mxu0 %v246
    %v454 = vpop.f32.mrf.mxu0
    %v455 = vadd.f32 %v95, %v454
    %456 = vmatmul.f32.gmra.mxu0 %v249
    %v457 = vpop.f32.mrf.mxu0
    %v458 = vadd.f32 %v95, %v457
    %459 = vmatmul.f32.gmra.mxu0 %v252
    %v460 = vpop.f32.mrf.mxu0
    %v461 = vadd.f32 %v95, %v460
    %462 = vmatmul.f32.gmra.mxu0 %v255
    %v463 = vpop.f32.mrf.mxu0
    %v464 = vadd.f32 %v95, %v463
    %465 = vmatmul.f32.gmra.mxu0 %v258
    %v466 = vpop.f32.mrf.mxu0
    %v467 = vadd.f32 %v95, %v466
    %468 = vmatmul.f32.gmra.mxu0 %v261
    %v469 = vpop.f32.mrf.mxu0
    %v470 = vadd.f32 %v95, %v469
    %471 = vmatmul.f32.gmra.mxu0 %v264
    %v472 = vpop.f32.mrf.mxu0
    %v473 = vadd.f32 %v95, %v472
    %474 = vmatmul.f32.gmra.mxu0 %v267
    %v475 = vpop.f32.mrf.mxu0
    %v476 = vadd.f32 %v95, %v475
    %477 = vmatmul.f32.gmra.mxu0 %v270
    %v478 = vpop.f32.mrf.mxu0
    %v479 = vadd.f32 %v95, %v478
    %480 = vmatmul.f32.gmra.mxu0 %v273
    %v481 = vpop.f32.mrf.mxu0
    %v482 = vadd.f32 %v95, %v481
    %483 = vmatmul.f32.gmra.mxu0 %v276
    %v484 = vpop.f32.mrf.mxu0
    %v485 = vadd.f32 %v95, %v484
    %486 = vmatmul.f32.gmra.mxu0 %v279
    %v487 = vpop.f32.mrf.mxu0
    %v488 = vadd.f32 %v95, %v487
    %489 = vmatmul.f32.gmra.mxu0 %v282
    %v490 = vpop.f32.mrf.mxu0
    %v491 = vadd.f32 %v95, %v490
    %492 = vmatmul.f32.gmra.mxu0 %v285
    %v493 = vpop.f32.mrf.mxu0
    %v494 = vadd.f32 %v95, %v493
    %495 = vmatmul.f32.gmra.mxu0 %v288
    %v496 = vpop.f32.mrf.mxu0
    %v497 = vadd.f32 %v95, %v496
    %498 = vdwg.mxu0
    %v499 = vmax.f32 %v308, 0.0
    %v500 = vmax.f32 %v311, 0.0
    %v501 = vmax.f32 %v314, 0.0
    %v502 = vmax.f32 %v317, 0.0
    %v503 = vmax.f32 %v320, 0.0
    %v504 = vmax.f32 %v323, 0.0
    %v505 = vmax.f32 %v326, 0.0
    %v506 = vmax.f32 %v329, 0.0
    %v507 = vmax.f32 %v332, 0.0
    %v508 = vmax.f32 %v335, 0.0
    %v509 = vmax.f32 %v338, 0.0
    %v510 = vmax.f32 %v341, 0.0
    %v511 = vmax.f32 %v344, 0.0
    %v512 = vmax.f32 %v347, 0.0
    %v513 = vmax.f32 %v350, 0.0
    %v514 = vmax.f32 %v353, 0.0
    %v515 = vmax.f32 %v356, 0.0
    %v516 = vmax.f32 %v359, 0.0
    %v517 = vmax.f32 %v362, 0.0
    %v518 = vmax.f32 %v365, 0.0
    %v519 = vmax.f32 %v368, 0.0
    %v520 = vmax.f32 %v371, 0.0
    %v521 = vmax.f32 %v374, 0.0
    %v522 = vmax.f32 %v377, 0.0
    %v523 = vmax.f32 %v380, 0.0
    %v524 = vmax.f32 %v383, 0.0
    %v525 = vmax.f32 %v386, 0.0
    %v526 = vmax.f32 %v389, 0.0
    %v527 = vmax.f32 %v392, 0.0
    %v528 = vmax.f32 %v395, 0.0
    %v529 = vmax.f32 %v398, 0.0
    %v530 = vmax.f32 %v401, 0.0
    %v531 = vmax.f32 %v404, 0.0
    %v532 = vmax.f32 %v407, 0.0
    %v533 = vmax.f32 %v410, 0.0
    %v534 = vmax.f32 %v413, 0.0
    %v535 = vmax.f32 %v416, 0.0
    %v536 = vmax.f32 %v419, 0.0
    %v537 = vmax.f32 %v422, 0.0
    %v538 = vmax.f32 %v425, 0.0
    %v539 = vmax.f32 %v428, 0.0
    %v540 = vmax.f32 %v431, 0.0
    %v541 = vmax.f32 %v434, 0.0
    %v542 = vmax.f32 %v437, 0.0
    %v543 = vmax.f32 %v440, 0.0
    %v544 = vmax.f32 %v443, 0.0
    %v545 = vmax.f32 %v446, 0.0
    %v546 = vmax.f32 %v449, 0.0
    %v547 = vmax.f32 %v452, 0.0
    %v548 = vmax.f32 %v455, 0.0
    %v549 = vmax.f32 %v458, 0.0
    %v550 = vmax.f32 %v461, 0.0
    %v551 = vmax.f32 %v464, 0.0
    %v552 = vmax.f32 %v467, 0.0
    %v553 = vmax.f32 %v470, 0.0
    %v554 = vmax.f32 %v473, 0.0
    %v555 = vmax.f32 %v476, 0.0
    %v556 = vmax.f32 %v479, 0.0
    %v557 = vmax.f32 %v482, 0.0
    %v558 = vmax.f32 %v485, 0.0
    %v559 = vmax.f32 %v488, 0.0
    %v560 = vmax.f32 %v491, 0.0
    %v561 = vmax.f32 %v494, 0.0
    %v562 = vmax.f32 %v497, 0.0
    %v563 = vld [vmem:[%s3] sm:$0xff]
    %v564 = vld [vmem:[%s3 + $0x8] sm:$0xff]
    %v565 = vld [vmem:[%s3 + $0x10] sm:$0xff]
    %v566 = vld [vmem:[%s3 + $0x18] sm:$0xff]
    %v567 = vld [vmem:[%s3 + $0x20] sm:$0xff]
    %v568 = vld [vmem:[%s3 + $0x28] sm:$0xff]
    %v569 = vld [vmem:[%s3 + $0x30] sm:$0xff]
    %v570 = vld [vmem:[%s3 + $0x38] sm:$0xff]
    %v571 = vld [vmem:[%s3 + $0x40] sm:$0xff]
    %v572 = vld [vmem:[%s3 + $0x48] sm:$0xff]
    %v573 = vld [vmem:[%s3 + $0x50] sm:$0xff]
    %v574 = vld [vmem:[%s3 + $0x58] sm:$0xff]
    %v575 = vld [vmem:[%s3 + $0x60] sm:$0xff]
    %v576 = vld [vmem:[%s3 + $0x68] sm:$0xff]
    %v577 = vld [vmem:[%s3 + $0x70] sm:$0xff]
    %v578 = vld [vmem:[%s3 + $0x78] sm:$0xff]
    %v579 = vld [vmem:[%s4] sm:$0x1]
    %v581 = vperm.slane %v579, 0
    %583 = vmatpush.msra.mxu0 %v578
    %584 = vmatpush.msra.mxu0 %v577
    %585 = vmatpush.msra.mxu0 %v576
    %586 = vmatpush.msra.mxu0 %v575
    %587 = vmatpush.msra.mxu0 %v574
    %588 = vmatpush.msra.mxu0 %v573
    %589 = vmatpush.msra.mxu0 %v572
    %590 = vmatpush.msra.mxu0 %v571
    %591 = vmatpush.msra.mxu0 %v570
    %592 = vmatpush.msra.mxu0 %v569
    %593 = vmatpush.msra.mxu0 %v568
    %594 = vmatpush.msra.mxu0 %v567
    %595 = vmatpush.msra.mxu0 %v566
    %596 = vmatpush.msra.mxu0 %v565
    %597 = vmatpush.msra.mxu0 %v564
    %598 = vmatpush.msra.mxu0 %v563
    %599 = vmatmul.f32.gmra.mxu0 %v499
    %v600 = vpop.f32.mrf.mxu0
    %v601 = vadd.f32 %v581, %v600
    %602 = vmatmul.f32.gmra.mxu0 %v500
    %v603 = vpop.f32.mrf.mxu0
    %v604 = vadd.f32 %v581, %v603
    %605 = vmatmul.f32.gmra.mxu0 %v501
    %v606 = vpop.f32.mrf.mxu0
    %v607 = vadd.f32 %v581, %v606
    %608 = vmatmul.f32.gmra.mxu0 %v502
    %v609 = vpop.f32.mrf.mxu0
    %v610 = vadd.f32 %v581, %v609
    %611 = vmatmul.f32.gmra.mxu0 %v503
    %v612 = vpop.f32.mrf.mxu0
    %v613 = vadd.f32 %v581, %v612
    %614 = vmatmul.f32.gmra.mxu0 %v504
    %v615 = vpop.f32.mrf.mxu0
    %v616 = vadd.f32 %v581, %v615
    %617 = vmatmul.f32.gmra.mxu0 %v505
    %v618 = vpop.f32.mrf.mxu0
    %v619 = vadd.f32 %v581, %v618
    %620 = vmatmul.f32.gmra.mxu0 %v506
    %v621 = vpop.f32.mrf.mxu0
    %v622 = vadd.f32 %v581, %v621
    %623 = vmatmul.f32.gmra.mxu0 %v507
    %v624 = vpop.f32.mrf.mxu0
    %v625 = vadd.f32 %v581, %v624
    %626 = vmatmul.f32.gmra.mxu0 %v508
    %v627 = vpop.f32.mrf.mxu0
    %v628 = vadd.f32 %v581, %v627
    %629 = vmatmul.f32.gmra.mxu0 %v509
    %v630 = vpop.f32.mrf.mxu0
    %v631 = vadd.f32 %v581, %v630
    %632 = vmatmul.f32.gmra.mxu0 %v510
    %v633 = vpop.f32.mrf.mxu0
    %v634 = vadd.f32 %v581, %v633
    %635 = vmatmul.f32.gmra.mxu0 %v511
    %v636 = vpop.f32.mrf.mxu0
    %v637 = vadd.f32 %v581, %v636
    %638 = vmatmul.f32.gmra.mxu0 %v512
    %v639 = vpop.f32.mrf.mxu0
    %v640 = vadd.f32 %v581, %v639
    %641 = vmatmul.f32.gmra.mxu0 %v513
    %v642 = vpop.f32.mrf.mxu0
    %v643 = vadd.f32 %v581, %v642
    %644 = vmatmul.f32.gmra.mxu0 %v514
    %v645 = vpop.f32.mrf.mxu0
    %v646 = vadd.f32 %v581, %v645
    %647 = vmatmul.f32.gmra.mxu0 %v515
    %v648 = vpop.f32.mrf.mxu0
    %v649 = vadd.f32 %v581, %v648
    %650 = vmatmul.f32.gmra.mxu0 %v516
    %v651 = vpop.f32.mrf.mxu0
    %v652 = vadd.f32 %v581, %v651
    %653 = vmatmul.f32.gmra.mxu0 %v517
    %v654 = vpop.f32.mrf.mxu0
    %v655 = vadd.f32 %v581, %v654
    %656 = vmatmul.f32.gmra.mxu0 %v518
    %v657 = vpop.f32.mrf.mxu0
    %v658 = vadd.f32 %v581, %v657
    %659 = vmatmul.f32.gmra.mxu0 %v519
    %v660 = vpop.f32.mrf.mxu0
    %v661 = vadd.f32 %v581, %v660
    %662 = vmatmul.f32.gmra.mxu0 %v520
    %v663 = vpop.f32.mrf.mxu0
    %v664 = vadd.f32 %v581, %v663
    %665 = vmatmul.f32.gmra.mxu0 %v521
    %v666 = vpop.f32.mrf.mxu0
    %v667 = vadd.f32 %v581, %v666
    %668 = vmatmul.f32.gmra.mxu0 %v522
    %v669 = vpop.f32.mrf.mxu0
    %v670 = vadd.f32 %v581, %v669
    %671 = vmatmul.f32.gmra.mxu0 %v523
    %v672 = vpop.f32.mrf.mxu0
    %v673 = vadd.f32 %v581, %v672
    %674 = vmatmul.f32.gmra.mxu0 %v524
    %v675 = vpop.f32.mrf.mxu0
    %v676 = vadd.f32 %v581, %v675
    %677 = vmatmul.f32.gmra.mxu0 %v525
    %v678 = vpop.f32.mrf.mxu0
    %v679 = vadd.f32 %v581, %v678
    %680 = vmatmul.f32.gmra.mxu0 %v526
    %v681 = vpop.f32.mrf.mxu0
    %v682 = vadd.f32 %v581, %v681
    %683 = vmatmul.f32.gmra.mxu0 %v527
    %v684 = vpop.f32.mrf.mxu0
    %v685 = vadd.f32 %v581, %v684
    %686 = vmatmul.f32.gmra.mxu0 %v528
    %v687 = vpop.f32.mrf.mxu0
    %v688 = vadd.f32 %v581, %v687
    %689 = vmatmul.f32.gmra.mxu0 %v529
    %v690 = vpop.f32.mrf.mxu0
    %v691 = vadd.f32 %v581, %v690
    %692 = vmatmul.f32.gmra.mxu0 %v530
    %v693 = vpop.f32.mrf.mxu0
    %v694 = vadd.f32 %v581, %v693
    %695 = vmatmul.f32.gmra.mxu0 %v531
    %v696 = vpop.f32.mrf.mxu0
    %v697 = vadd.f32 %v581, %v696
    %698 = vmatmul.f32.gmra.mxu0 %v532
    %v699 = vpop.f32.mrf.mxu0
    %v700 = vadd.f32 %v581, %v699
    %701 = vmatmul.f32.gmra.mxu0 %v533
    %v702 = vpop.f32.mrf.mxu0
    %v703 = vadd.f32 %v581, %v702
    %704 = vmatmul.f32.gmra.mxu0 %v534
    %v705 = vpop.f32.mrf.mxu0
    %v706 = vadd.f32 %v581, %v705
    %707 = vmatmul.f32.gmra.mxu0 %v535
    %v708 = vpop.f32.mrf.mxu0
    %v709 = vadd.f32 %v581, %v708
    %710 = vmatmul.f32.gmra.mxu0 %v536
    %v711 = vpop.f32.mrf.mxu0
    %v712 = vadd.f32 %v581, %v711
    %713 = vmatmul.f32.gmra.mxu0 %v537
    %v714 = vpop.f32.mrf.mxu0
    %v715 = vadd.f32 %v581, %v714
    %716 = vmatmul.f32.gmra.mxu0 %v538
    %v717 = vpop.f32.mrf.mxu0
    %v718 = vadd.f32 %v581, %v717
    %719 = vmatmul.f32.gmra.mxu0 %v539
    %v720 = vpop.f32.mrf.mxu0
    %v721 = vadd.f32 %v581, %v720
    %722 = vmatmul.f32.gmra.mxu0 %v540
    %v723 = vpop.f32.mrf.mxu0
    %v724 = vadd.f32 %v581, %v723
    %725 = vmatmul.f32.gmra.mxu0 %v541
    %v726 = vpop.f32.mrf.mxu0
    %v727 = vadd.f32 %v581, %v726
    %728 = vmatmul.f32.gmra.mxu0 %v542
    %v729 = vpop.f32.mrf.mxu0
    %v730 = vadd.f32 %v581, %v729
    %731 = vmatmul.f32.gmra.mxu0 %v543
    %v732 = vpop.f32.mrf.mxu0
    %v733 = vadd.f32 %v581, %v732
    %734 = vmatmul.f32.gmra.mxu0 %v544
    %v735 = vpop.f32.mrf.mxu0
    %v736 = vadd.f32 %v581, %v735
    %737 = vmatmul.f32.gmra.mxu0 %v545
    %v738 = vpop.f32.mrf.mxu0
    %v739 = vadd.f32 %v581, %v738
    %740 = vmatmul.f32.gmra.mxu0 %v546
    %v741 = vpop.f32.mrf.mxu0
    %v742 = vadd.f32 %v581, %v741
    %743 = vmatmul.f32.gmra.mxu0 %v547
    %v744 = vpop.f32.mrf.mxu0
    %v745 = vadd.f32 %v581, %v744
    %746 = vmatmul.f32.gmra.mxu0 %v548
    %v747 = vpop.f32.mrf.mxu0
    %v748 = vadd.f32 %v581, %v747
    %749 = vmatmul.f32.gmra.mxu0 %v549
    %v750 = vpop.f32.mrf.mxu0
    %v751 = vadd.f32 %v581, %v750
    %752 = vmatmul.f32.gmra.mxu0 %v550
    %v753 = vpop.f32.mrf.mxu0
    %v754 = vadd.f32 %v581, %v753
    %755 = vmatmul.f32.gmra.mxu0 %v551
    %v756 = vpop.f32.mrf.mxu0
    %v757 = vadd.f32 %v581, %v756
    %758 = vmatmul.f32.gmra.mxu0 %v552
    %v759 = vpop.f32.mrf.mxu0
    %v760 = vadd.f32 %v581, %v759
    %761 = vmatmul.f32.gmra.mxu0 %v553
    %v762 = vpop.f32.mrf.mxu0
    %v763 = vadd.f32 %v581, %v762
    %764 = vmatmul.f32.gmra.mxu0 %v554
    %v765 = vpop.f32.mrf.mxu0
    %v766 = vadd.f32 %v581, %v765
    %767 = vmatmul.f32.gmra.mxu0 %v555
    %v768 = vpop.f32.mrf.mxu0
    %v769 = vadd.f32 %v581, %v768
    %770 = vmatmul.f32.gmra.mxu0 %v556
    %v771 = vpop.f32.mrf.mxu0
    %v772 = vadd.f32 %v581, %v771
    %773 = vmatmul.f32.gmra.mxu0 %v557
    %v774 = vpop.f32.mrf.mxu0
    %v775 = vadd.f32 %v581, %v774
    %776 = vmatmul.f32.gmra.mxu0 %v558
    %v777 = vpop.f32.mrf.mxu0
    %v778 = vadd.f32 %v581, %v777
    %779 = vmatmul.f32.gmra.mxu0 %v559
    %v780 = vpop.f32.mrf.mxu0
    %v781 = vadd.f32 %v581, %v780
    %782 = vmatmul.f32.gmra.mxu0 %v560
    %v783 = vpop.f32.mrf.mxu0
    %v784 = vadd.f32 %v581, %v783
    %785 = vmatmul.f32.gmra.mxu0 %v561
    %v786 = vpop.f32.mrf.mxu0
    %v787 = vadd.f32 %v581, %v786
    %788 = vmatmul.f32.gmra.mxu0 %v562
    %v789 = vpop.f32.mrf.mxu0
    %v790 = vadd.f32 %v581, %v789
    %791 = vdwg.mxu0
    %v792 = vmax.f32 %v601, 0.0
    %v793 = vmax.f32 %v604, 0.0
    %v794 = vmax.f32 %v607, 0.0
    %v795 = vmax.f32 %v610, 0.0
    %v796 = vmax.f32 %v613, 0.0
    %v797 = vmax.f32 %v616, 0.0
    %v798 = vmax.f32 %v619, 0.0
    %v799 = vmax.f32 %v622, 0.0
    %v800 = vmax.f32 %v625, 0.0
    %v801 = vmax.f32 %v628, 0.0
    %v802 = vmax.f32 %v631, 0.0
    %v803 = vmax.f32 %v634, 0.0
    %v804 = vmax.f32 %v637, 0.0
    %v805 = vmax.f32 %v640, 0.0
    %v806 = vmax.f32 %v643, 0.0
    %v807 = vmax.f32 %v646, 0.0
    %v808 = vmax.f32 %v649, 0.0
    %v809 = vmax.f32 %v652, 0.0
    %v810 = vmax.f32 %v655, 0.0
    %v811 = vmax.f32 %v658, 0.0
    %v812 = vmax.f32 %v661, 0.0
    %v813 = vmax.f32 %v664, 0.0
    %v814 = vmax.f32 %v667, 0.0
    %v815 = vmax.f32 %v670, 0.0
    %v816 = vmax.f32 %v673, 0.0
    %v817 = vmax.f32 %v676, 0.0
    %v818 = vmax.f32 %v679, 0.0
    %v819 = vmax.f32 %v682, 0.0
    %v820 = vmax.f32 %v685, 0.0
    %v821 = vmax.f32 %v688, 0.0
    %v822 = vmax.f32 %v691, 0.0
    %v823 = vmax.f32 %v694, 0.0
    %v824 = vmax.f32 %v697, 0.0
    %v825 = vmax.f32 %v700, 0.0
    %v826 = vmax.f32 %v703, 0.0
    %v827 = vmax.f32 %v706, 0.0
    %v828 = vmax.f32 %v709, 0.0
    %v829 = vmax.f32 %v712, 0.0
    %v830 = vmax.f32 %v715, 0.0
    %v831 = vmax.f32 %v718, 0.0
    %v832 = vmax.f32 %v721, 0.0
    %v833 = vmax.f32 %v724, 0.0
    %v834 = vmax.f32 %v727, 0.0
    %v835 = vmax.f32 %v730, 0.0
    %v836 = vmax.f32 %v733, 0.0
    %v837 = vmax.f32 %v736, 0.0
    %v838 = vmax.f32 %v739, 0.0
    %v839 = vmax.f32 %v742, 0.0
    %v840 = vmax.f32 %v745, 0.0
    %v841 = vmax.f32 %v748, 0.0
    %v842 = vmax.f32 %v751, 0.0
    %v843 = vmax.f32 %v754, 0.0
    %v844 = vmax.f32 %v757, 0.0
    %v845 = vmax.f32 %v760, 0.0
    %v846 = vmax.f32 %v763, 0.0
    %v847 = vmax.f32 %v766, 0.0
    %v848 = vmax.f32 %v769, 0.0
    %v849 = vmax.f32 %v772, 0.0
    %v850 = vmax.f32 %v775, 0.0
    %v851 = vmax.f32 %v778, 0.0
    %v852 = vmax.f32 %v781, 0.0
    %v853 = vmax.f32 %v784, 0.0
    %v854 = vmax.f32 %v787, 0.0
    %v855 = vmax.f32 %v790, 0.0
    %v856 = vld [vmem:[%s5] sm:$0xff]
    %v857 = vld [vmem:[%s5 + $0x8] sm:$0xff]
    %v858 = vld [vmem:[%s5 + $0x10] sm:$0xff]
    %v859 = vld [vmem:[%s5 + $0x18] sm:$0xff]
    %v860 = vld [vmem:[%s5 + $0x20] sm:$0xff]
    %v861 = vld [vmem:[%s5 + $0x28] sm:$0xff]
    %v862 = vld [vmem:[%s5 + $0x30] sm:$0xff]
    %v863 = vld [vmem:[%s5 + $0x38] sm:$0xff]
    %v864 = vld [vmem:[%s5 + $0x40] sm:$0xff]
    %v865 = vld [vmem:[%s5 + $0x48] sm:$0xff]
    %v866 = vld [vmem:[%s5 + $0x50] sm:$0xff]
    %v867 = vld [vmem:[%s5 + $0x58] sm:$0xff]
    %v868 = vld [vmem:[%s5 + $0x60] sm:$0xff]
    %v869 = vld [vmem:[%s5 + $0x68] sm:$0xff]
    %v870 = vld [vmem:[%s5 + $0x70] sm:$0xff]
    %v871 = vld [vmem:[%s5 + $0x78] sm:$0xff]
    %v872 = vld [vmem:[%s6] sm:$0x1]
    %v874 = vperm.slane %v872, 0
    %876 = vmatpush.msra.mxu0 %v871
    %877 = vmatpush.msra.mxu0 %v870
    %878 = vmatpush.msra.mxu0 %v869
    %879 = vmatpush.msra.mxu0 %v868
    %880 = vmatpush.msra.mxu0 %v867
    %881 = vmatpush.msra.mxu0 %v866
    %882 = vmatpush.msra.mxu0 %v865
    %883 = vmatpush.msra.mxu0 %v864
    %884 = vmatpush.msra.mxu0 %v863
    %885 = vmatpush.msra.mxu0 %v862
    %886 = vmatpush.msra.mxu0 %v861
    %887 = vmatpush.msra.mxu0 %v860
    %888 = vmatpush.msra.mxu0 %v859
    %889 = vmatpush.msra.mxu0 %v858
    %890 = vmatpush.msra.mxu0 %v857
    %891 = vmatpush.msra.mxu0 %v856
    %892 = vmatmul.f32.gmra.mxu0 %v792
    %v893 = vpop.f32.mrf.mxu0
    %v894 = vadd.f32 %v874, %v893
    %895 = vmatmul.f32.gmra.mxu0 %v793
    %v896 = vpop.f32.mrf.mxu0
    %v897 = vadd.f32 %v874, %v896
    %898 = vmatmul.f32.gmra.mxu0 %v794
    %v899 = vpop.f32.mrf.mxu0
    %v900 = vadd.f32 %v874, %v899
    %901 = vmatmul.f32.gmra.mxu0 %v795
    %v902 = vpop.f32.mrf.mxu0
    %v903 = vadd.f32 %v874, %v902
    %904 = vmatmul.f32.gmra.mxu0 %v796
    %v905 = vpop.f32.mrf.mxu0
    %v906 = vadd.f32 %v874, %v905
    %907 = vmatmul.f32.gmra.mxu0 %v797
    %v908 = vpop.f32.mrf.mxu0
    %v909 = vadd.f32 %v874, %v908
    %910 = vmatmul.f32.gmra.mxu0 %v798
    %v911 = vpop.f32.mrf.mxu0
    %v912 = vadd.f32 %v874, %v911
    %913 = vmatmul.f32.gmra.mxu0 %v799
    %v914 = vpop.f32.mrf.mxu0
    %v915 = vadd.f32 %v874, %v914
    %916 = vmatmul.f32.gmra.mxu0 %v800
    %v917 = vpop.f32.mrf.mxu0
    %v918 = vadd.f32 %v874, %v917
    %919 = vmatmul.f32.gmra.mxu0 %v801
    %v920 = vpop.f32.mrf.mxu0
    %v921 = vadd.f32 %v874, %v920
    %922 = vmatmul.f32.gmra.mxu0 %v802
    %v923 = vpop.f32.mrf.mxu0
    %v924 = vadd.f32 %v874, %v923
    %925 = vmatmul.f32.gmra.mxu0 %v803
    %v926 = vpop.f32.mrf.mxu0
    %v927 = vadd.f32 %v874, %v926
    %928 = vmatmul.f32.gmra.mxu0 %v804
    %v929 = vpop.f32.mrf.mxu0
    %v930 = vadd.f32 %v874, %v929
    %931 = vmatmul.f32.gmra.mxu0 %v805
    %v932 = vpop.f32.mrf.mxu0
    %v933 = vadd.f32 %v874, %v932
    %934 = vmatmul.f32.gmra.mxu0 %v806
    %v935 = vpop.f32.mrf.mxu0
    %v936 = vadd.f32 %v874, %v935
    %937 = vmatmul.f32.gmra.mxu0 %v807
    %v938 = vpop.f32.mrf.mxu0
    %v939 = vadd.f32 %v874, %v938
    %940 = vmatmul.f32.gmra.mxu0 %v808
    %v941 = vpop.f32.mrf.mxu0
    %v942 = vadd.f32 %v874, %v941
    %943 = vmatmul.f32.gmra.mxu0 %v809
    %v944 = vpop.f32.mrf.mxu0
    %v945 = vadd.f32 %v874, %v944
    %946 = vmatmul.f32.gmra.mxu0 %v810
    %v947 = vpop.f32.mrf.mxu0
    %v948 = vadd.f32 %v874, %v947
    %949 = vmatmul.f32.gmra.mxu0 %v811
    %v950 = vpop.f32.mrf.mxu0
    %v951 = vadd.f32 %v874, %v950
    %952 = vmatmul.f32.gmra.mxu0 %v812
    %v953 = vpop.f32.mrf.mxu0
    %v954 = vadd.f32 %v874, %v953
    %955 = vmatmul.f32.gmra.mxu0 %v813
    %v956 = vpop.f32.mrf.mxu0
    %v957 = vadd.f32 %v874, %v956
    %958 = vmatmul.f32.gmra.mxu0 %v814
    %v959 = vpop.f32.mrf.mxu0
    %v960 = vadd.f32 %v874, %v959
    %961 = vmatmul.f32.gmra.mxu0 %v815
    %v962 = vpop.f32.mrf.mxu0
    %v963 = vadd.f32 %v874, %v962
    %964 = vmatmul.f32.gmra.mxu0 %v816
    %v965 = vpop.f32.mrf.mxu0
    %v966 = vadd.f32 %v874, %v965
    %967 = vmatmul.f32.gmra.mxu0 %v817
    %v968 = vpop.f32.mrf.mxu0
    %v969 = vadd.f32 %v874, %v968
    %970 = vmatmul.f32.gmra.mxu0 %v818
    %v971 = vpop.f32.mrf.mxu0
    %v972 = vadd.f32 %v874, %v971
    %973 = vmatmul.f32.gmra.mxu0 %v819
    %v974 = vpop.f32.mrf.mxu0
    %v975 = vadd.f32 %v874, %v974
    %976 = vmatmul.f32.gmra.mxu0 %v820
    %v977 = vpop.f32.mrf.mxu0
    %v978 = vadd.f32 %v874, %v977
    %979 = vmatmul.f32.gmra.mxu0 %v821
    %v980 = vpop.f32.mrf.mxu0
    %v981 = vadd.f32 %v874, %v980
    %982 = vmatmul.f32.gmra.mxu0 %v822
    %v983 = vpop.f32.mrf.mxu0
    %v984 = vadd.f32 %v874, %v983
    %985 = vmatmul.f32.gmra.mxu0 %v823
    %v986 = vpop.f32.mrf.mxu0
    %v987 = vadd.f32 %v874, %v986
    %988 = vmatmul.f32.gmra.mxu0 %v824
    %v989 = vpop.f32.mrf.mxu0
    %v990 = vadd.f32 %v874, %v989
    %991 = vmatmul.f32.gmra.mxu0 %v825
    %v992 = vpop.f32.mrf.mxu0
    %v993 = vadd.f32 %v874, %v992
    %994 = vmatmul.f32.gmra.mxu0 %v826
    %v995 = vpop.f32.mrf.mxu0
    %v996 = vadd.f32 %v874, %v995
    %997 = vmatmul.f32.gmra.mxu0 %v827
    %v998 = vpop.f32.mrf.mxu0
    %v999 = vadd.f32 %v874, %v998
    %1000 = vmatmul.f32.gmra.mxu0 %v828
    %v1001 = vpop.f32.mrf.mxu0
    %v1002 = vadd.f32 %v874, %v1001
    %1003 = vmatmul.f32.gmra.mxu0 %v829
    %v1004 = vpop.f32.mrf.mxu0
    %v1005 = vadd.f32 %v874, %v1004
    %1006 = vmatmul.f32.gmra.mxu0 %v830
    %v1007 = vpop.f32.mrf.mxu0
    %v1008 = vadd.f32 %v874, %v1007
    %1009 = vmatmul.f32.gmra.mxu0 %v831
    %v1010 = vpop.f32.mrf.mxu0
    %v1011 = vadd.f32 %v874, %v1010
    %1012 = vmatmul.f32.gmra.mxu0 %v832
    %v1013 = vpop.f32.mrf.mxu0
    %v1014 = vadd.f32 %v874, %v1013
    %1015 = vmatmul.f32.gmra.mxu0 %v833
    %v1016 = vpop.f32.mrf.mxu0
    %v1017 = vadd.f32 %v874, %v1016
    %1018 = vmatmul.f32.gmra.mxu0 %v834
    %v1019 = vpop.f32.mrf.mxu0
    %v1020 = vadd.f32 %v874, %v1019
    %1021 = vmatmul.f32.gmra.mxu0 %v835
    %v1022 = vpop.f32.mrf.mxu0
    %v1023 = vadd.f32 %v874, %v1022
    %1024 = vmatmul.f32.gmra.mxu0 %v836
    %v1025 = vpop.f32.mrf.mxu0
    %v1026 = vadd.f32 %v874, %v1025
    %1027 = vmatmul.f32.gmra.mxu0 %v837
    %v1028 = vpop.f32.mrf.mxu0
    %v1029 = vadd.f32 %v874, %v1028
    %1030 = vmatmul.f32.gmra.mxu0 %v838
    %v1031 = vpop.f32.mrf.mxu0
    %v1032 = vadd.f32 %v874, %v1031
    %1033 = vmatmul.f32.gmra.mxu0 %v839
    %v1034 = vpop.f32.mrf.mxu0
    %v1035 = vadd.f32 %v874, %v1034
    %1036 = vmatmul.f32.gmra.mxu0 %v840
    %v1037 = vpop.f32.mrf.mxu0
    %v1038 = vadd.f32 %v874, %v1037
    %1039 = vmatmul.f32.gmra.mxu0 %v841
    %v1040 = vpop.f32.mrf.mxu0
    %v1041 = vadd.f32 %v874, %v1040
    %1042 = vmatmul.f32.gmra.mxu0 %v842
    %v1043 = vpop.f32.mrf.mxu0
    %v1044 = vadd.f32 %v874, %v1043
    %1045 = vmatmul.f32.gmra.mxu0 %v843
    %v1046 = vpop.f32.mrf.mxu0
    %v1047 = vadd.f32 %v874, %v1046
    %1048 = vmatmul.f32.gmra.mxu0 %v844
    %v1049 = vpop.f32.mrf.mxu0
    %v1050 = vadd.f32 %v874, %v1049
    %1051 = vmatmul.f32.gmra.mxu0 %v845
    %v1052 = vpop.f32.mrf.mxu0
    %v1053 = vadd.f32 %v874, %v1052
    %1054 = vmatmul.f32.gmra.mxu0 %v846
    %v1055 = vpop.f32.mrf.mxu0
    %v1056 = vadd.f32 %v874, %v1055
    %1057 = vmatmul.f32.gmra.mxu0 %v847
    %v1058 = vpop.f32.mrf.mxu0
    %v1059 = vadd.f32 %v874, %v1058
    %1060 = vmatmul.f32.gmra.mxu0 %v848
    %v1061 = vpop.f32.mrf.mxu0
    %v1062 = vadd.f32 %v874, %v1061
    %1063 = vmatmul.f32.gmra.mxu0 %v849
    %v1064 = vpop.f32.mrf.mxu0
    %v1065 = vadd.f32 %v874, %v1064
    %1066 = vmatmul.f32.gmra.mxu0 %v850
    %v1067 = vpop.f32.mrf.mxu0
    %v1068 = vadd.f32 %v874, %v1067
    %1069 = vmatmul.f32.gmra.mxu0 %v851
    %v1070 = vpop.f32.mrf.mxu0
    %v1071 = vadd.f32 %v874, %v1070
    %1072 = vmatmul.f32.gmra.mxu0 %v852
    %v1073 = vpop.f32.mrf.mxu0
    %v1074 = vadd.f32 %v874, %v1073
    %1075 = vmatmul.f32.gmra.mxu0 %v853
    %v1076 = vpop.f32.mrf.mxu0
    %v1077 = vadd.f32 %v874, %v1076
    %1078 = vmatmul.f32.gmra.mxu0 %v854
    %v1079 = vpop.f32.mrf.mxu0
    %v1080 = vadd.f32 %v874, %v1079
    %1081 = vmatmul.f32.gmra.mxu0 %v855
    %v1082 = vpop.f32.mrf.mxu0
    %v1083 = vadd.f32 %v874, %v1082
    %1084 = vdwg.mxu0
    %1085 = vxpose.xlu0.b32.start [1/16] %v894, 128
    %1086 = vxpose.xlu0.b32.cont [2/16] %v897, 128
    %1087 = vxpose.xlu0.b32.cont [3/16] %v900, 128
    %1088 = vxpose.xlu0.b32.cont [4/16] %v903, 128
    %1089 = vxpose.xlu0.b32.cont [5/16] %v906, 128
    %1090 = vxpose.xlu0.b32.cont [6/16] %v909, 128
    %1091 = vxpose.xlu0.b32.cont [7/16] %v912, 128
    %1092 = vxpose.xlu0.b32.cont [8/16] %v915, 128
    %1093 = vxpose.xlu0.b32.cont [9/16] %v918, 128
    %1094 = vxpose.xlu0.b32.cont [10/16] %v921, 128
    %1095 = vxpose.xlu0.b32.cont [11/16] %v924, 128
    %1096 = vxpose.xlu0.b32.cont [12/16] %v927, 128
    %1097 = vxpose.xlu0.b32.cont [13/16] %v930, 128
    %1098 = vxpose.xlu0.b32.cont [14/16] %v933, 128
    %1099 = vxpose.xlu0.b32.cont [15/16] %v936, 128
    %1100 = vxpose.xlu0.b32.end [16/16] %v939, 128
    %v1101 = vpop.trf.xlu0
    %v1102 = vpop.trf.xlu0
    %v1103 = vpop.trf.xlu0
    %v1104 = vpop.trf.xlu0
    %v1105 = vpop.trf.xlu0
    %v1106 = vpop.trf.xlu0
    %v1107 = vpop.trf.xlu0
    %v1108 = vpop.trf.xlu0
    %v1109 = vpop.trf.xlu0
    %v1110 = vpop.trf.xlu0
    %v1111 = vpop.trf.xlu0
    %v1112 = vpop.trf.xlu0
    %v1113 = vpop.trf.xlu0
    %v1114 = vpop.trf.xlu0
    %v1115 = vpop.trf.xlu0
    %v1116 = vpop.trf.xlu0
    %1117 = vxpose.xlu0.b32.start [1/16] %v942, 128
    %1118 = vxpose.xlu0.b32.cont [2/16] %v945, 128
    %1119 = vxpose.xlu0.b32.cont [3/16] %v948, 128
    %1120 = vxpose.xlu0.b32.cont [4/16] %v951, 128
    %1121 = vxpose.xlu0.b32.cont [5/16] %v954, 128
    %1122 = vxpose.xlu0.b32.cont [6/16] %v957, 128
    %1123 = vxpose.xlu0.b32.cont [7/16] %v960, 128
    %1124 = vxpose.xlu0.b32.cont [8/16] %v963, 128
    %1125 = vxpose.xlu0.b32.cont [9/16] %v966, 128
    %1126 = vxpose.xlu0.b32.cont [10/16] %v969, 128
    %1127 = vxpose.xlu0.b32.cont [11/16] %v972, 128
    %1128 = vxpose.xlu0.b32.cont [12/16] %v975, 128
    %1129 = vxpose.xlu0.b32.cont [13/16] %v978, 128
    %1130 = vxpose.xlu0.b32.cont [14/16] %v981, 128
    %1131 = vxpose.xlu0.b32.cont [15/16] %v984, 128
    %1132 = vxpose.xlu0.b32.end [16/16] %v987, 128
    %v1133 = vpop.trf.xlu0
    %v1134 = vpop.trf.xlu0
    %v1135 = vpop.trf.xlu0
    %v1136 = vpop.trf.xlu0
    %v1137 = vpop.trf.xlu0
    %v1138 = vpop.trf.xlu0
    %v1139 = vpop.trf.xlu0
    %v1140 = vpop.trf.xlu0
    %v1141 = vpop.trf.xlu0
    %v1142 = vpop.trf.xlu0
    %v1143 = vpop.trf.xlu0
    %v1144 = vpop.trf.xlu0
    %v1145 = vpop.trf.xlu0
    %v1146 = vpop.trf.xlu0
    %v1147 = vpop.trf.xlu0
    %v1148 = vpop.trf.xlu0
    %1149 = vxpose.xlu0.b32.start [1/16] %v990, 128
    %1150 = vxpose.xlu0.b32.cont [2/16] %v993, 128
    %1151 = vxpose.xlu0.b32.cont [3/16] %v996, 128
    %1152 = vxpose.xlu0.b32.cont [4/16] %v999, 128
    %1153 = vxpose.xlu0.b32.cont [5/16] %v1002, 128
    %1154 = vxpose.xlu0.b32.cont [6/16] %v1005, 128
    %1155 = vxpose.xlu0.b32.cont [7/16] %v1008, 128
    %1156 = vxpose.xlu0.b32.cont [8/16] %v1011, 128
    %1157 = vxpose.xlu0.b32.cont [9/16] %v1014, 128
    %1158 = vxpose.xlu0.b32.cont [10/16] %v1017, 128
    %1159 = vxpose.xlu0.b32.cont [11/16] %v1020, 128
    %1160 = vxpose.xlu0.b32.cont [12/16] %v1023, 128
    %1161 = vxpose.xlu0.b32.cont [13/16] %v1026, 128
    %1162 = vxpose.xlu0.b32.cont [14/16] %v1029, 128
    %1163 = vxpose.xlu0.b32.cont [15/16] %v1032, 128
    %1164 = vxpose.xlu0.b32.end [16/16] %v1035, 128
    %v1165 = vpop.trf.xlu0
    %v1166 = vpop.trf.xlu0
    %v1167 = vpop.trf.xlu0
    %v1168 = vpop.trf.xlu0
    %v1169 = vpop.trf.xlu0
    %v1170 = vpop.trf.xlu0
    %v1171 = vpop.trf.xlu0
    %v1172 = vpop.trf.xlu0
    %v1173 = vpop.trf.xlu0
    %v1174 = vpop.trf.xlu0
    %v1175 = vpop.trf.xlu0
    %v1176 = vpop.trf.xlu0
    %v1177 = vpop.trf.xlu0
    %v1178 = vpop.trf.xlu0
    %v1179 = vpop.trf.xlu0
    %v1180 = vpop.trf.xlu0
    %1181 = vxpose.xlu0.b32.start [1/16] %v1038, 128
    %1182 = vxpose.xlu0.b32.cont [2/16] %v1041, 128
    %1183 = vxpose.xlu0.b32.cont [3/16] %v1044, 128
    %1184 = vxpose.xlu0.b32.cont [4/16] %v1047, 128
    %1185 = vxpose.xlu0.b32.cont [5/16] %v1050, 128
    %1186 = vxpose.xlu0.b32.cont [6/16] %v1053, 128
    %1187 = vxpose.xlu0.b32.cont [7/16] %v1056, 128
    %1188 = vxpose.xlu0.b32.cont [8/16] %v1059, 128
    %1189 = vxpose.xlu0.b32.cont [9/16] %v1062, 128
    %1190 = vxpose.xlu0.b32.cont [10/16] %v1065, 128
    %1191 = vxpose.xlu0.b32.cont [11/16] %v1068, 128
    %1192 = vxpose.xlu0.b32.cont [12/16] %v1071, 128
    %1193 = vxpose.xlu0.b32.cont [13/16] %v1074, 128
    %1194 = vxpose.xlu0.b32.cont [14/16] %v1077, 128
    %1195 = vxpose.xlu0.b32.cont [15/16] %v1080, 128
    %1196 = vxpose.xlu0.b32.end [16/16] %v1083, 128
    %v1197 = vpop.trf.xlu0
    %v1198 = vpop.trf.xlu0
    %v1199 = vpop.trf.xlu0
    %v1200 = vpop.trf.xlu0
    %v1201 = vpop.trf.xlu0
    %v1202 = vpop.trf.xlu0
    %v1203 = vpop.trf.xlu0
    %v1204 = vpop.trf.xlu0
    %v1205 = vpop.trf.xlu0
    %v1206 = vpop.trf.xlu0
    %v1207 = vpop.trf.xlu0
    %v1208 = vpop.trf.xlu0
    %v1209 = vpop.trf.xlu0
    %v1210 = vpop.trf.xlu0
    %v1211 = vpop.trf.xlu0
    %v1212 = vpop.trf.xlu0
    %v1217 = vrot.slane %v1133, 7
    %v1218 = vrot.slane %v1165, 6
    %v1219 = vrot.slane %v1197, 5
    %vm1220 = vcmask 1040384
    %v1221 = vsel %vm1220, %v1101, %v1217
    %vm1222 = vcmask 1042434
    %v1223 = vsel %vm1222, %v1218, %v1219
    %vm1224 = vcmask 1041408
    %v1225 = vsel %vm1224, %v1221, %v1223
    %v1227 = vlaneseq
    %vm1228 = vcmp.ge.s32.totalorder %v1227, 0
    %vm1229 = vcmp.lt.s32.totalorder %v1227, 512
    %vm1230 = vmand %vm1228, %vm1229
    %1231 = vst.msk [vmem:[#allocation2] sm:$0xf] %vm1230, %v1225
    // Predicated region
    $region30: #{tpu_custom_call.1} parent=1 // pred_check
      _
    $region31: #{tpu_custom_call.1} parent=1 // pred_check_branch
      %1233 = sbr.rel (0) target = $region33
    $region32: #{tpu_custom_call.1} parent=1 // pred_region
      %1235 = vsyncadd [#allocation3], 0
      %s1237 = sshll.u32 [#allocation2], 4
      %s1238 = int_to_ptr.vmem [resolvable:$true] %s1237
      %s1239 = sshll.u32 %s7, 4
      %s1240 = int_to_ptr.hbm [resolvable:$true] %s1239
      %1242 = dma.vmem_to_hbm [thread:$0]  %s1238, 64, %s1240, [#allocation3]
    $region33: #{tpu_custom_call.1} parent=1 // pred_fallthru
      _
    // Predicated region
    $region34: #{tpu_custom_call.1} parent=1 // pred_check
      _
    $region35: #{tpu_custom_call.1} parent=1 // pred_check_branch
      %1244 = sbr.rel (0) target = $region37
    $region36: #{tpu_custom_call.1} parent=1 // pred_region
      %1246 = dma.done [#allocation3], 64
    $region37: #{tpu_custom_call.1} parent=1 // pred_fallthru
      _
    %1247 = vsyncpa [#allocation3], 1

</llo_original>
